<compile_context>
chip_gen: v5e
topology: v5e:2x2
jax: 0.10.0
libtpu: 0.0.40
codegen_flags: <defaults>
</compile_context>

<pallas_src>
import numpy as np
import jax
import jax.numpy as jnp
from jax.experimental import pallas as pl
from jax.experimental.pallas import tpu as pltpu


def _bilinear_upsample_matrix(L, scale=2):
    """PyTorch nn.Upsample(scale_factor=scale, mode='bilinear',
    align_corners=False) interpolation weights along one axis, as a dense
    (scale*L, L) matrix (half-pixel centers, edge clamp)."""
    Lo = L * scale
    U = np.zeros((Lo, L), np.float64)
    for o in range(Lo):
        src = (o + 0.5) / scale - 0.5
        if src < 0.0:
            src = 0.0
        i0 = min(int(np.floor(src)), L - 1)
        i1 = min(i0 + 1, L - 1)
        frac = src - i0
        U[o, i0] += 1.0 - frac
        U[o, i1] += frac
    return U


def _up_kernel(x_ref, w_ref, u2t_ref, o_ref):
    # x_ref   : (N*Cin,  HW)       f32  VMEM -- all batches' input planes (grid-constant)
    # w_ref   : (N*Cout, N*Cin)    f32  VMEM -- block-diag 1x1-conv weights  (grid-constant)
    # u2t_ref : (HW, 4HW // T)     bf16 VMEM -- this step's column slice of kron(UH,UW)^T
    # o_ref   : (N*Cout, 4HW // T)      VMEM -- lane-dense output slab
    #
    # 1x1 conv for BOTH batches in one MXU dot (M = N*Cout = 8 fills sublanes).
    # Tiny (K=16) and recomputed per lane-tile step; negligible vs. DMA time.
    y = jnp.dot(w_ref[...], x_ref[...].astype(jnp.float32),
                preferred_element_type=jnp.float32)            # (N*Cout, HW) f32

    # Bilinear x2 upsample for all channels/batches at once: one native-bf16
    # MXU matmul with f32 accumulation; result slab is lane-dense (mult of 128)
    # so stores are unmasked full-width vst.
    out = jnp.dot(y.astype(jnp.bfloat16), u2t_ref[...],
                  preferred_element_type=jnp.float32)          # (N*Cout, 4HW/T)

    o_ref[...] = out.astype(o_ref.dtype)


def _build_call(N, Cin, Cout, H, W, dtype, lane_tiles, single_buffer_consts):
    HW, HW4 = H * W, 4 * H * W
    tile = HW4 // lane_tiles
    # Single-buffer the grid-invariant operands (their index_map is constant,
    # double-buffering buys nothing).  Fallback path omits pipeline_mode if the
    # installed jax's TPU pipeliner rejects buffer_count=1.
    const_kw = dict(pipeline_mode=pl.Buffered(1)) if single_buffer_consts else {}
    grid_spec = pltpu.PrefetchScalarGridSpec(
        num_scalar_prefetch=0,
        grid=(lane_tiles,),
        in_specs=[
            pl.BlockSpec((N * Cin, HW), lambda t: (0, 0), **const_kw),
            pl.BlockSpec((N * Cout, N * Cin), lambda t: (0, 0), **const_kw),
            pl.BlockSpec((HW, tile), lambda t: (0, t)),
        ],
        out_specs=pl.BlockSpec((N * Cout, tile), lambda t: (0, t)),
    )
    return pl.pallas_call(
        _up_kernel,
        out_shape=jax.ShapeDtypeStruct((N * Cout, HW4), dtype),
        grid_spec=grid_spec,
        compiler_params=pltpu.CompilerParams(
            dimension_semantics=("parallel",),
            vmem_limit_bytes=32 * 1024 * 1024,
        ),
    )


def up_forward(x, conv_w, u2t_bf16, *, lane_tiles=2):
    """x: (N, Cin, H, W); conv_w: (Cout, Cin); u2t_bf16: (H*W, 4*H*W) bf16.
    Returns (N, Cout, 2H, 2W)."""
    N, Cin, H, W = x.shape
    Cout = conv_w.shape[0]
    HW, HW4 = H * W, 4 * H * W
    assert HW4 % lane_tiles == 0 and (HW4 // lane_tiles) % 128 == 0

    xs = x.reshape(N * Cin, HW)                                   # contiguous, free
    # Block-diagonal weight kron(I_N, W): stacks batches on the M axis so one
    # plain MXU dot does the conv for every batch.
    w_bd = jnp.kron(jnp.eye(N, dtype=conv_w.dtype), conv_w)       # (N*Cout, N*Cin)

    out_flat = None
    for sb in (True, False):
        try:
            out_flat = _build_call(N, Cin, Cout, H, W, x.dtype,
                                   lane_tiles, sb)(xs, w_bd, u2t_bf16)
            break
        except Exception:
            if not sb:
                raise
    return out_flat.reshape(N, Cout, 2 * H, 2 * W)                # contiguous, free


if __name__ == "__main__":
    # Module config: Up(in_channels=8, chan_factor=2, bias=False)
    N, Cin, H, W = 2, 8, 16, 16
    chan_factor = 2
    Cout = Cin // chan_factor

    key = jax.random.PRNGKey(0)
    kx, kw = jax.random.split(key)
    x = jax.random.normal(kx, (N, Cin, H, W), dtype=jnp.float32)
    # deterministic conv weight init (PyTorch-style uniform bound for 1x1 conv)
    bound = 1.0 / np.sqrt(Cin)
    conv_w = jax.random.uniform(kw, (Cout, Cin), jnp.float32, -bound, bound)

    uh64 = _bilinear_upsample_matrix(H, 2)            # (2H, H)
    uw64 = _bilinear_upsample_matrix(W, 2)            # (2W, W)
    # combined separable operator:
    #   out[c, oh*2W + ow] = sum_{h,w} y[c, h*W + w] * UH[oh,h] * UW[ow,w]
    u2t64 = np.kron(uh64, uw64).T                     # (H*W, 4*H*W)
    # entries are dyadic multiples of 1/16 -> bit-exact in bfloat16
    u2t = jnp.asarray(u2t64, jnp.bfloat16)

    out = jax.block_until_ready(up_forward(x, conv_w, u2t))
    assert out.shape == (N, Cout, 2 * H, 2 * W), out.shape

    # float64 numpy reference of the same math (conv1x1 + separable bilinear x2)
    xn = np.asarray(x, np.float64)
    wn = np.asarray(conv_w, np.float64)
    y_ref = np.einsum("dc,nchw->ndhw", wn, xn)
    z_ref = np.einsum("vh,ndhw->ndvw", uh64, y_ref)
    ref = np.einsum("ndvw,uw->ndvu", z_ref, uw64)

    # Deliberate tolerance: the kernel rounds the conv output y to bf16 before
    # the (bit-exact bf16) upsample matmul, so |err| <= max|y| * 2^-9 ~ 5e-3
    # here; everything else accumulates in f32.  A wrong kron ordering or
    # transpose would produce O(1) errors and still fail this check.
    outn = np.asarray(out, np.float64)
    if not np.allclose(outn, ref, rtol=1e-2, atol=1e-2):
        raise AssertionError(
            "mismatch: max abs err = %g" % np.max(np.abs(outn - ref)))

    print("KERNEL_OK")
</pallas_src>

<mosaic_0001>
module attributes {stable_mosaic.version = 11 : i64} {
  func.func @_up_kernel(%arg0: i32, %arg1: memref<16x256xf32, #tpu.memory_space<vmem>>, %arg2: memref<8x16xf32, #tpu.memory_space<vmem>>, %arg3: memref<256x512xbf16, #tpu.memory_space<vmem>>, %arg4: memref<8x512xf32, #tpu.memory_space<vmem>>) attributes {dimension_semantics = [#tpu.dimension_semantics<parallel>], iteration_bounds = array<i64: 2>, scalar_prefetch = 0 : i64, scratch_operands = 0 : i64, tpu.core_type = #tpu.core_type<tc>, window_params = [{pipeline_mode = #tpu.pipeline_mode<synchronous>, transform_indices = @transform_0, window_bounds = array<i64: 16, 256>}, {pipeline_mode = #tpu.pipeline_mode<synchronous>, transform_indices = @transform_1, window_bounds = array<i64: 8, 16>}, {transform_indices = @transform_2, window_bounds = array<i64: 256, 512>}, {transform_indices = @transform_3, window_bounds = array<i64: 8, 512>}]} {
    %c0 = arith.constant 0 : index
    %c0_0 = arith.constant 0 : index
    %0 = vector.load %arg2[%c0, %c0_0] : memref<8x16xf32, #tpu.memory_space<vmem>>, vector<8x16xf32>
    %c0_1 = arith.constant 0 : index
    %c0_2 = arith.constant 0 : index
    %1 = vector.load %arg1[%c0_1, %c0_2] : memref<16x256xf32, #tpu.memory_space<vmem>>, vector<16x256xf32>
    %cst = arith.constant dense<0.000000e+00> : vector<8x256xf32>
    %2 = tpu.matmul %0, %1, %cst {dimension_numbers = #tpu.dot_dimension_numbers<[1], [0], [0], [1], [0, 0, 1, 1], [], []>} : vector<8x16xf32>, vector<16x256xf32>, vector<8x256xf32> -> vector<8x256xf32>
    %3 = arith.truncf %2 : vector<8x256xf32> to vector<8x256xbf16>
    %c0_3 = arith.constant 0 : index
    %c0_4 = arith.constant 0 : index
    %4 = vector.load %arg3[%c0_3, %c0_4] : memref<256x512xbf16, #tpu.memory_space<vmem>>, vector<256x512xbf16>
    %cst_5 = arith.constant dense<0.000000e+00> : vector<8x512xf32>
    %5 = tpu.matmul %3, %4, %cst_5 {dimension_numbers = #tpu.dot_dimension_numbers<[1], [0], [0], [1], [0, 0, 1, 1], [], []>} : vector<8x256xbf16>, vector<256x512xbf16>, vector<8x512xf32> -> vector<8x512xf32>
    %c0_6 = arith.constant 0 : index
    %c0_7 = arith.constant 0 : index
    %6 = vector.load %arg4[%c0_6, %c0_7] : memref<8x512xf32, #tpu.memory_space<vmem>>, vector<8x512xf32>
    tpu.vector_store %arg4[%c0_6, %c0_7], %5 {strides = array<i32>} : memref<8x512xf32, #tpu.memory_space<vmem>>, vector<8x512xf32>,
    return
  }
  func.func @transform_0(%arg0: i32) -> (i32, i32) {
    %c0_i32 = arith.constant 0 : i32
    %c0_i32_0 = arith.constant 0 : i32
    %c0_i32_1 = arith.constant 0 : i32
    return %c0_i32, %c0_i32_0 : i32, i32
  }
  func.func @transform_1(%arg0: i32) -> (i32, i32) {
    %c0_i32 = arith.constant 0 : i32
    %c0_i32_0 = arith.constant 0 : i32
    %c0_i32_1 = arith.constant 0 : i32
    return %c0_i32, %c0_i32_0 : i32, i32
  }
  func.func @transform_2(%arg0: i32) -> (i32, i32) {
    %c0_i32 = arith.constant 0 : i32
    %c0_i32_0 = arith.constant 0 : i32
    return %c0_i32, %arg0 : i32, i32
  }
  func.func @transform_3(%arg0: i32) -> (i32, i32) {
    %c0_i32 = arith.constant 0 : i32
    %c0_i32_0 = arith.constant 0 : i32
    return %c0_i32, %arg0 : i32, i32
  }
}

module attributes {stable_mosaic.version = 11 : i64} {
  func.func @_up_kernel(%arg0: i32, %arg1: memref<16x256xf32, #tpu.memory_space<vmem>>, %arg2: memref<8x16xf32, #tpu.memory_space<vmem>>, %arg3: memref<256x512xbf16, #tpu.memory_space<vmem>>, %arg4: memref<8x512xf32, #tpu.memory_space<vmem>>) attributes {dimension_semantics = [#tpu.dimension_semantics<parallel>], iteration_bounds = array<i64: 2>, scalar_prefetch = 0 : i64, scratch_operands = 0 : i64, tpu.core_type = #tpu.core_type<tc>, window_params = [{pipeline_mode = #tpu.pipeline_mode<synchronous>, transform_indices = @transform_0, window_bounds = array<i64: 16, 256>}, {pipeline_mode = #tpu.pipeline_mode<synchronous>, transform_indices = @transform_1, window_bounds = array<i64: 8, 16>}, {transform_indices = @transform_2, window_bounds = array<i64: 256, 512>}, {transform_indices = @transform_3, window_bounds = array<i64: 8, 512>}]} {
    %c0 = arith.constant 0 : index
    %c0_0 = arith.constant 0 : index
    %0 = vector.load %arg2[%c0, %c0_0] : memref<8x16xf32, #tpu.memory_space<vmem>>, vector<8x16xf32>
    %c0_1 = arith.constant 0 : index
    %c0_2 = arith.constant 0 : index
    %1 = vector.load %arg1[%c0_1, %c0_2] : memref<16x256xf32, #tpu.memory_space<vmem>>, vector<16x256xf32>
    %cst = arith.constant dense<0.000000e+00> : vector<8x256xf32>
    %2 = tpu.matmul %0, %1, %cst {dimension_numbers = #tpu.dot_dimension_numbers<[1], [0], [0], [1], [0, 0, 1, 1], [], []>} : vector<8x16xf32>, vector<16x256xf32>, vector<8x256xf32> -> vector<8x256xf32>
    %3 = arith.truncf %2 : vector<8x256xf32> to vector<8x256xbf16>
    %c0_3 = arith.constant 0 : index
    %c0_4 = arith.constant 0 : index
    %4 = vector.load %arg3[%c0_3, %c0_4] : memref<256x512xbf16, #tpu.memory_space<vmem>>, vector<256x512xbf16>
    %cst_5 = arith.constant dense<0.000000e+00> : vector<8x512xf32>
    %5 = tpu.matmul %3, %4, %cst_5 {dimension_numbers = #tpu.dot_dimension_numbers<[1], [0], [0], [1], [0, 0, 1, 1], [], []>} : vector<8x256xbf16>, vector<256x512xbf16>, vector<8x512xf32> -> vector<8x512xf32>
    %c0_6 = arith.constant 0 : index
    %c0_7 = arith.constant 0 : index
    %6 = vector.load %arg4[%c0_6, %c0_7] : memref<8x512xf32, #tpu.memory_space<vmem>>, vector<8x512xf32>
    tpu.vector_store %arg4[%c0_6, %c0_7], %5 {strides = array<i32>} : memref<8x512xf32, #tpu.memory_space<vmem>>, vector<8x512xf32>,
    return
  }
  func.func @transform_0(%arg0: i32) -> (i32, i32) {
    %c0_i32 = arith.constant 0 : i32
    %c0_i32_0 = arith.constant 0 : i32
    %c0_i32_1 = arith.constant 0 : i32
    return %c0_i32, %c0_i32_0 : i32, i32
  }
  func.func @transform_1(%arg0: i32) -> (i32, i32) {
    %c0_i32 = arith.constant 0 : i32
    %c0_i32_0 = arith.constant 0 : i32
    %c0_i32_1 = arith.constant 0 : i32
    return %c0_i32, %c0_i32_0 : i32, i32
  }
  func.func @transform_2(%arg0: i32) -> (i32, i32) {
    %c0_i32 = arith.constant 0 : i32
    %c0_i32_0 = arith.constant 0 : i32
    return %c0_i32, %arg0 : i32, i32
  }
  func.func @transform_3(%arg0: i32) -> (i32, i32) {
    %c0_i32 = arith.constant 0 : i32
    %c0_i32_0 = arith.constant 0 : i32
    return %c0_i32, %arg0 : i32, i32
  }
}

</mosaic_0001>

<llo_original>
// kernel: tpu_custom_call.1
$region0: #{tpu_custom_call.1}
  #allocation0 [shape = 'u32[]', space=smem, size = 0x4, offset = 0x4, fixed_abs, tag = 'smem constant byte address 0x4 - core index']
  #allocation1 [shape = 'u32[72,128]{1,0:T(1,128)}', space=vmem, size = 0x9000, scoped, tag = 'internal scratch']
  %s0 = inlined_call_operand.hbm [shape: f32[16,256], index: 0, kind: input, shape index: {}]
  %s1 = inlined_call_operand.hbm [shape: f32[8,16], index: 1, kind: input, shape index: {}]
  %s2 = inlined_call_operand.hbm [shape: bf16[256,1024], index: 2, kind: input, shape index: {}]
  %s3 = inlined_call_operand.hbm [shape: f32[8,1024], index: 3, kind: output, shape index: {}]
  %s4 = sld [smem:[#allocation0]]
  $region57: #{tpu_custom_call.1} parent=0
    _
  %s6 = ssub.s32 1, %s4
  %s7 = scalar_select 0, %s6, %s4
  $region1: #{tpu_custom_call.1} parent=0
    #allocation2 [shape = 'u8[16384]{0}', space=vmem, size = 0x4000, scoped, tag = 'input window, operand 0, single buffered']
    #allocation3 [shape = 's32[2]{0}', space=sflag, size = 0x8, scoped, tag = 'scoped memory for tpu_custom_call.1']
    #allocation4 [shape = 's32[2]{0}', space=sflag, size = 0x8, scoped, tag = 'scoped memory for tpu_custom_call.1']
    #allocation5 [shape = 'u8[4096]{0}', space=vmem, size = 0x1000, scoped, tag = 'input window, operand 1, single buffered']
    #allocation6 [shape = 's32[1]{0}', space=sflag, size = 0x4, scoped, tag = 'scoped memory for tpu_custom_call.1']
    #allocation7 [shape = 'u8[524288]{0}', space=vmem, size = 0x80000, scoped, tag = 'input window, operand 2']
    #allocation8 [shape = 'u8[32768]{0}', space=vmem, size = 0x8000, scoped, tag = 'output window, operand 0']
    %8 = vsyncpa [#allocation3], 0
    %9 = vsyncpa [#allocation6], 0
    %10 = vsyncpa [#allocation4], 0
    %s11 = scalar_lea.sflag [#allocation4], 1
    %12 = vsyncpa %s11, 0
    loop: start=0, step=1, limit=4
    $region2: #{tpu_custom_call.1} parent=1 // loop_pre_header
      _
    $region3: #{tpu_custom_call.1} parent=1 // loop_header
      %s14 = sphi 0, %s18
      %p15 = scmp.ge.s32.totalorder %s14, 4
      %s22 = sphi 0, %s22
      %s24 = sphi 0, %s22
      %s25 = sphi 0, %s24
      %s39 = sphi 0, %s25
      %s43 = sphi 0, %s43
      %s45 = sphi 0, %s43
      %s46 = sphi 0, %s45
      %s60 = sphi 0, %s46
      %s66 = sphi 0, %s68
      %s69 = sphi 0, %s66
      %s70 = sphi 0, %s69
      %s86 = sphi 0, %s70
      %s92 = sphi 0, %s94
      %s95 = sphi 0, %s92
      %s96 = sphi 0, %s95
      %s112 = sphi 0, %s96
    $region4: #{tpu_custom_call.1} parent=1 // loop_header_branch
      %17 = sbr.rel (%p15) target = $region8
    $region5: #{tpu_custom_call.1} parent=1 // loop_body
      %s19 = ssub.s32 %s14, 1
      %s20 = ssub.s32 %s14, 2
      %s21 = sadd.s32 %s14, 1
      %s23 = sadd.s32 %s22, 1
      %p26 = scmp.eq.s32.totalorder %s14, 1
      %p27 = scmp.ne.s32.totalorder %s22, %s24
      %p28 = scmp.eq.s32.totalorder %s14, 0
      %p29 = por %p27, %p28
      %p30 = scmp.ne.s32.totalorder %s22, %s24
      %p31 = scmp.eq.s32.totalorder %s19, 1
      %p32 = por %p30, %p31
      %p33 = scmp.ne.s32.totalorder %s24, %s25
      %p34 = scmp.eq.s32.totalorder %s19, 0
      %p35 = por %p33, %p34
      %p36 = scmp.ne.s32.totalorder %s24, %s25
      %p37 = scmp.eq.s32.totalorder %s20, 1
      %p38 = por %p36, %p37
      %p40 = scmp.ne.s32.totalorder %s25, %s39
      %p41 = scmp.eq.s32.totalorder %s20, 0
      %p42 = por %p40, %p41
      %s44 = sadd.s32 %s43, 1
      %p47 = scmp.eq.s32.totalorder %s14, 1
      %p48 = scmp.ne.s32.totalorder %s43, %s45
      %p49 = scmp.eq.s32.totalorder %s14, 0
      %p50 = por %p48, %p49
      %p51 = scmp.ne.s32.totalorder %s43, %s45
      %p52 = scmp.eq.s32.totalorder %s19, 1
      %p53 = por %p51, %p52
      %p54 = scmp.ne.s32.totalorder %s45, %s46
      %p55 = scmp.eq.s32.totalorder %s19, 0
      %p56 = por %p54, %p55
      %p57 = scmp.ne.s32.totalorder %s45, %s46
      %p58 = scmp.eq.s32.totalorder %s20, 1
      %p59 = por %p57, %p58
      %p61 = scmp.ne.s32.totalorder %s46, %s60
      %p62 = scmp.eq.s32.totalorder %s20, 0
      %p63 = por %p61, %p62
      %s64 = ssub.s32 %s14, %s21
      %p65 = scmp.eq.s32.totalorder %s64, 0
      %s67 = sadd.s32 %s66, 1
      %s68 = scalar_select %p65, %s66, %s67
      %p71 = pneg %p65
      %p72 = scmp.eq.s32.totalorder %s14, 1
      %p73 = por %p71, %p72
      %p74 = scmp.ne.s32.totalorder %s66, %s69
      %p75 = scmp.eq.s32.totalorder %s14, 0
      %p76 = por %p74, %p75
      %p77 = scmp.ne.s32.totalorder %s66, %s69
      %p78 = scmp.eq.s32.totalorder %s19, 1
      %p79 = por %p77, %p78
      %p80 = scmp.ne.s32.totalorder %s69, %s70
      %p81 = scmp.eq.s32.totalorder %s19, 0
      %p82 = por %p80, %p81
      %p83 = scmp.ne.s32.totalorder %s69, %s70
      %p84 = scmp.eq.s32.totalorder %s20, 1
      %p85 = por %p83, %p84
      %p87 = scmp.ne.s32.totalorder %s70, %s86
      %p88 = scmp.eq.s32.totalorder %s20, 0
      %p89 = por %p87, %p88
      %s90 = ssub.s32 %s14, %s21
      %p91 = scmp.eq.s32.totalorder %s90, 0
      %s93 = sadd.s32 %s92, 1
      %s94 = scalar_select %p91, %s92, %s93
      %p97 = pneg %p91
      %p98 = scmp.eq.s32.totalorder %s14, 1
      %p99 = por %p97, %p98
      %p100 = scmp.ne.s32.totalorder %s92, %s95
      %p101 = scmp.eq.s32.totalorder %s14, 0
      %p102 = por %p100, %p101
      %p103 = scmp.ne.s32.totalorder %s92, %s95
      %p104 = scmp.eq.s32.totalorder %s19, 1
      %p105 = por %p103, %p104
      %p106 = scmp.ne.s32.totalorder %s95, %s96
      %p107 = scmp.eq.s32.totalorder %s19, 0
      %p108 = por %p106, %p107
      %p109 = scmp.ne.s32.totalorder %s95, %s96
      %p110 = scmp.eq.s32.totalorder %s20, 1
      %p111 = por %p109, %p110
      %p113 = scmp.ne.s32.totalorder %s96, %s112
      %p114 = scmp.eq.s32.totalorder %s20, 0
      %p115 = por %p113, %p114
      %p116 = scmp.le.s32.totalorder 1, %s14
      %p117 = scmp.lt.s32.totalorder %s14, 3
      %p118 = pnand %p116, %p117
      %p119 = pneg %p118
      // Predicated region
      $region9: #{tpu_custom_call.1} parent=5 // pred_check
        _
      $region10: #{tpu_custom_call.1} parent=5 // pred_check_branch
        %121 = sbr.rel (%p118) target = $region12
      $region11: #{tpu_custom_call.1} parent=5 // pred_region
        %s122 = ssub.s32 %s14, 1
        // Predicated region
        $region13: #{tpu_custom_call.1} parent=11 // pred_check
          %p123 = pneg %p35
        $region14: #{tpu_custom_call.1} parent=11 // pred_check_branch
          %125 = sbr.rel (%p123) target = $region16
        $region15: #{tpu_custom_call.1} parent=11 // pred_region
          %127 = vsyncadd [#allocation3], 0
          %s128 = sshll.u32 %s0, 4
          %s129 = int_to_ptr.hbm [resolvable:$true] %s128
          %s130 = sshll.u32 [#allocation2], 4
          %s131 = int_to_ptr.vmem [resolvable:$true] %s130
          %136 = dma.hbm_to_vmem [thread:$0]  %s129, 512, %s131, [#allocation3], 256, 256, 16
        $region16: #{tpu_custom_call.1} parent=11 // pred_fallthru
          _
        // Predicated region
        $region17: #{tpu_custom_call.1} parent=11 // pred_check
          %p137 = pneg %p56
        $region18: #{tpu_custom_call.1} parent=11 // pred_check_branch
          %139 = sbr.rel (%p137) target = $region20
        $region19: #{tpu_custom_call.1} parent=11 // pred_region
          %141 = vsyncadd [#allocation6], 0
          %s143 = sshll.u32 %s1, 4
          %s144 = int_to_ptr.hbm [resolvable:$true] %s143
          %s145 = sshll.u32 [#allocation5], 4
          %s146 = int_to_ptr.vmem [resolvable:$true] %s145
          %148 = dma.hbm_to_vmem [thread:$0]  %s144, 128, %s146, [#allocation6]
        $region20: #{tpu_custom_call.1} parent=11 // pred_fallthru
          _
      $region12: #{tpu_custom_call.1} parent=5 // pred_fallthru
        _
      %p149 = scmp.lt.s32.totalorder %s14, 2
      // Predicated region
      $region21: #{tpu_custom_call.1} parent=5 // pred_check
        %p150 = pneg %p149
      $region22: #{tpu_custom_call.1} parent=5 // pred_check_branch
        %152 = sbr.rel (%p150) target = $region24
      $region23: #{tpu_custom_call.1} parent=5 // pred_region
        // Predicated region
        $region25: #{tpu_custom_call.1} parent=23 // pred_check
          %p153 = pneg %p76
        $region26: #{tpu_custom_call.1} parent=23 // pred_check_branch
          %155 = sbr.rel (%p153) target = $region28
        $region27: #{tpu_custom_call.1} parent=23 // pred_region
          %s156 = sand.u32 %s14, 1
          %s157 = scalar_lea.sflag [#allocation3], %s156
          %s158 = sand.u32 %s66, 1
          %s159 = smul.addr %s158, 512
          %s160 = scalar_lea.vmem [#allocation7], %s159
          %s161 = smul.u32 4, %s14
          %163 = vsyncadd %s157, 0
          %s164 = smul.addr %s161, 4
          %s165 = scalar_lea.hbm %s2, %s164
          %s166 = sshll.u32 %s165, 4
          %s167 = int_to_ptr.hbm [resolvable:$true] %s166
          %s168 = sshll.u32 %s160, 4
          %s169 = int_to_ptr.vmem [resolvable:$true] %s168
          %174 = dma.hbm_to_vmem [thread:$0]  %s167, 8192, %s169, %s157, 512, 256, 16
        $region28: #{tpu_custom_call.1} parent=23 // pred_fallthru
          _
      $region24: #{tpu_custom_call.1} parent=5 // pred_fallthru
        _
      %p175 = scmp.le.s32.totalorder 1, %s14
      %p176 = scmp.lt.s32.totalorder %s14, 3
      %p177 = pnand %p175, %p176
      %p178 = pneg %p177
      // Predicated region
      $region29: #{tpu_custom_call.1} parent=5 // pred_check
        _
      $region30: #{tpu_custom_call.1} parent=5 // pred_check_branch
        %180 = sbr.rel (%p177) target = $region32
      $region31: #{tpu_custom_call.1} parent=5 // pred_region
        %s181 = ssub.s32 %s14, 1
        // Predicated region
        $region33: #{tpu_custom_call.1} parent=31 // pred_check
          %p182 = pneg %p35
        $region34: #{tpu_custom_call.1} parent=31 // pred_check_branch
          %184 = sbr.rel (%p182) target = $region36
        $region35: #{tpu_custom_call.1} parent=31 // pred_region
          %186 = dma.done [#allocation3], 512
        $region36: #{tpu_custom_call.1} parent=31 // pred_fallthru
          _
        // Predicated region
        $region37: #{tpu_custom_call.1} parent=31 // pred_check
          %p187 = pneg %p56
        $region38: #{tpu_custom_call.1} parent=31 // pred_check_branch
          %189 = sbr.rel (%p187) target = $region40
        $region39: #{tpu_custom_call.1} parent=31 // pred_region
          %191 = dma.done [#allocation6], 128
        $region40: #{tpu_custom_call.1} parent=31 // pred_fallthru
          _
        %s192 = sand.u32 %s19, 1
        %s193 = scalar_lea.sflag [#allocation3], %s192
        %s194 = sand.u32 %s69, 1
        %s195 = smul.addr %s194, 512
        %s196 = scalar_lea.vmem [#allocation7], %s195
        // Predicated region
        $region41: #{tpu_custom_call.1} parent=31 // pred_check
          %p197 = pneg %p82
        $region42: #{tpu_custom_call.1} parent=31 // pred_check_branch
          %199 = sbr.rel (%p197) target = $region44
        $region43: #{tpu_custom_call.1} parent=31 // pred_region
          %201 = dma.done %s193, 8192
        $region44: #{tpu_custom_call.1} parent=31 // pred_fallthru
          _
        %p202 = pneg %p35
        %p203 = pneg %p32
        %p204 = pneg %p56
        %p205 = pneg %p53
        %s206 = sand.u32 %s19, 1
        %s207 = scalar_lea.sflag [#allocation3], %s206
        %s208 = sand.u32 %s69, 1
        %s209 = smul.addr %s208, 512
        %s210 = scalar_lea.vmem [#allocation7], %s209
        %p211 = pneg %p82
        %p212 = pneg %p79
        %p213 = pneg %p108
        %p214 = pneg %p105
        %s215 = sand.u32 %s95, 1
        %s216 = scalar_lea.sflag [#allocation4], %s215
        %s217 = sand.u32 %s95, 1
        %s218 = smul.addr %s217, 32
        %s219 = scalar_lea.vmem [#allocation8], %s218
        %s220 = smul.u32 4, %s19
        %s221 = smul.u32 4, %s19
        %v222 = vld [vmem:[#allocation5] sm:$0xff]
        %v223 = vld [vmem:[#allocation2] sm:$0xff]
        %v224 = vld [vmem:[#allocation2 + $0x8] sm:$0xff]
        %v225 = vld [vmem:[#allocation2 + $0x10] sm:$0xff]
        %v226 = vld [vmem:[#allocation2 + $0x18] sm:$0xff]
        %vm227 = vcmask 130048
        %v229 = vsel %vm227, %v222, 0
        %231 = vmatpush.msra.mxu0 0.0
        %232 = vmatpush.msra.mxu0 0.0
        %233 = vmatpush.msra.mxu0 0.0
        %234 = vmatpush.msra.mxu0 0.0
        %235 = vmatpush.msra.mxu0 0.0
        %236 = vmatpush.msra.mxu0 0.0
        %237 = vmatpush.msra.mxu0 0.0
        %238 = vmatpush.msra.mxu0 0.0
        %239 = vmatpush.msra.mxu0 0.0
        %240 = vmatpush.msra.mxu0 0.0
        %241 = vmatpush.msra.mxu0 0.0
        %242 = vmatpush.msra.mxu0 0.0
        %243 = vmatpush.msra.mxu0 0.0
        %244 = vmatpush.msra.mxu0 0.0
        %245 = vmatpush.msra.mxu0 %v225
        %246 = vmatpush.msra.mxu0 %v223
        %247 = vmatmul.f32.gmra.mxu0 %v229
        %v248 = vpop.f32.mrf.mxu0
        %v249 = vadd.f32 0.0, %v248
        %250 = vdwg.mxu0
        %251 = vmatpush.msra.mxu0 0.0
        %252 = vmatpush.msra.mxu0 0.0
        %253 = vmatpush.msra.mxu0 0.0
        %254 = vmatpush.msra.mxu0 0.0
        %255 = vmatpush.msra.mxu0 0.0
        %256 = vmatpush.msra.mxu0 0.0
        %257 = vmatpush.msra.mxu0 0.0
        %258 = vmatpush.msra.mxu0 0.0
        %259 = vmatpush.msra.mxu0 0.0
        %260 = vmatpush.msra.mxu0 0.0
        %261 = vmatpush.msra.mxu0 0.0
        %262 = vmatpush.msra.mxu0 0.0
        %263 = vmatpush.msra.mxu0 0.0
        %264 = vmatpush.msra.mxu0 0.0
        %265 = vmatpush.msra.mxu0 %v226
        %266 = vmatpush.msra.mxu0 %v224
        %267 = vmatmul.f32.gmra.mxu0 %v229
        %v268 = vpop.f32.mrf.mxu0
        %v269 = vadd.f32 0.0, %v268
        %270 = vdwg.mxu0
        %v271 = vpack.c.bf16 %v249, %v249
        %v272 = vpack.c.bf16 %v269, %v269
        %v273 = vld [vmem:[%s196] sm:$0xff]
        %v274 = vld [vmem:[%s196 + $0x8] sm:$0xff]
        %v275 = vld [vmem:[%s196 + $0x10] sm:$0xff]
        %v276 = vld [vmem:[%s196 + $0x18] sm:$0xff]
        %v277 = vld [vmem:[%s196 + $0x20] sm:$0xff]
        %v278 = vld [vmem:[%s196 + $0x28] sm:$0xff]
        %v279 = vld [vmem:[%s196 + $0x30] sm:$0xff]
        %v280 = vld [vmem:[%s196 + $0x38] sm:$0xff]
        %v281 = vld [vmem:[%s196 + $0x40] sm:$0xff]
        %v282 = vld [vmem:[%s196 + $0x48] sm:$0xff]
        %v283 = vld [vmem:[%s196 + $0x50] sm:$0xff]
        %v284 = vld [vmem:[%s196 + $0x58] sm:$0xff]
        %v285 = vld [vmem:[%s196 + $0x60] sm:$0xff]
        %v286 = vld [vmem:[%s196 + $0x68] sm:$0xff]
        %v287 = vld [vmem:[%s196 + $0x70] sm:$0xff]
        %v288 = vld [vmem:[%s196 + $0x78] sm:$0xff]
        %v289 = vld [vmem:[%s196 + $0x80] sm:$0xff]
        %v290 = vld [vmem:[%s196 + $0x88] sm:$0xff]
        %v291 = vld [vmem:[%s196 + $0x90] sm:$0xff]
        %v292 = vld [vmem:[%s196 + $0x98] sm:$0xff]
        %v293 = vld [vmem:[%s196 + $0xa0] sm:$0xff]
        %v294 = vld [vmem:[%s196 + $0xa8] sm:$0xff]
        %v295 = vld [vmem:[%s196 + $0xb0] sm:$0xff]
        %v296 = vld [vmem:[%s196 + $0xb8] sm:$0xff]
        %v297 = vld [vmem:[%s196 + $0xc0] sm:$0xff]
        %v298 = vld [vmem:[%s196 + $0xc8] sm:$0xff]
        %v299 = vld [vmem:[%s196 + $0xd0] sm:$0xff]
        %v300 = vld [vmem:[%s196 + $0xd8] sm:$0xff]
        %v301 = vld [vmem:[%s196 + $0xe0] sm:$0xff]
        %v302 = vld [vmem:[%s196 + $0xe8] sm:$0xff]
        %v303 = vld [vmem:[%s196 + $0xf0] sm:$0xff]
        %v304 = vld [vmem:[%s196 + $0xf8] sm:$0xff]
        %v305 = vld [vmem:[%s196 + $0x100] sm:$0xff]
        %v306 = vld [vmem:[%s196 + $0x108] sm:$0xff]
        %v307 = vld [vmem:[%s196 + $0x110] sm:$0xff]
        %v308 = vld [vmem:[%s196 + $0x118] sm:$0xff]
        %v309 = vld [vmem:[%s196 + $0x120] sm:$0xff]
        %v310 = vld [vmem:[%s196 + $0x128] sm:$0xff]
        %v311 = vld [vmem:[%s196 + $0x130] sm:$0xff]
        %v312 = vld [vmem:[%s196 + $0x138] sm:$0xff]
        %v313 = vld [vmem:[%s196 + $0x140] sm:$0xff]
        %v314 = vld [vmem:[%s196 + $0x148] sm:$0xff]
        %v315 = vld [vmem:[%s196 + $0x150] sm:$0xff]
        %v316 = vld [vmem:[%s196 + $0x158] sm:$0xff]
        %v317 = vld [vmem:[%s196 + $0x160] sm:$0xff]
        %v318 = vld [vmem:[%s196 + $0x168] sm:$0xff]
        %v319 = vld [vmem:[%s196 + $0x170] sm:$0xff]
        %v320 = vld [vmem:[%s196 + $0x178] sm:$0xff]
        %v321 = vld [vmem:[%s196 + $0x180] sm:$0xff]
        %v322 = vld [vmem:[%s196 + $0x188] sm:$0xff]
        %v323 = vld [vmem:[%s196 + $0x190] sm:$0xff]
        %v324 = vld [vmem:[%s196 + $0x198] sm:$0xff]
        %v325 = vld [vmem:[%s196 + $0x1a0] sm:$0xff]
        %v326 = vld [vmem:[%s196 + $0x1a8] sm:$0xff]
        %v327 = vld [vmem:[%s196 + $0x1b0] sm:$0xff]
        %v328 = vld [vmem:[%s196 + $0x1b8] sm:$0xff]
        %v329 = vld [vmem:[%s196 + $0x1c0] sm:$0xff]
        %v330 = vld [vmem:[%s196 + $0x1c8] sm:$0xff]
        %v331 = vld [vmem:[%s196 + $0x1d0] sm:$0xff]
        %v332 = vld [vmem:[%s196 + $0x1d8] sm:$0xff]
        %v333 = vld [vmem:[%s196 + $0x1e0] sm:$0xff]
        %v334 = vld [vmem:[%s196 + $0x1e8] sm:$0xff]
        %v335 = vld [vmem:[%s196 + $0x1f0] sm:$0xff]
        %v336 = vld [vmem:[%s196 + $0x1f8] sm:$0xff]
        %v401 = vunpack.c.l.b16 %v273
        %v402 = vunpack.c.h.b16 %v273
        %v403 = vunpack.c.l.b16 %v274
        %v404 = vunpack.c.h.b16 %v274
        %v405 = vunpack.c.l.b16 %v275
        %v406 = vunpack.c.h.b16 %v275
        %v407 = vunpack.c.l.b16 %v276
        %v408 = vunpack.c.h.b16 %v276
        %v409 = vunpack.c.l.b16 %v277
        %v410 = vunpack.c.h.b16 %v277
        %v411 = vunpack.c.l.b16 %v278
        %v412 = vunpack.c.h.b16 %v278
        %v413 = vunpack.c.l.b16 %v279
        %v414 = vunpack.c.h.b16 %v279
        %v415 = vunpack.c.l.b16 %v280
        %v416 = vunpack.c.h.b16 %v280
        %v417 = vunpack.c.l.b16 %v281
        %v418 = vunpack.c.h.b16 %v281
        %v419 = vunpack.c.l.b16 %v282
        %v420 = vunpack.c.h.b16 %v282
        %v421 = vunpack.c.l.b16 %v283
        %v422 = vunpack.c.h.b16 %v283
        %v423 = vunpack.c.l.b16 %v284
        %v424 = vunpack.c.h.b16 %v284
        %v425 = vunpack.c.l.b16 %v285
        %v426 = vunpack.c.h.b16 %v285
        %v427 = vunpack.c.l.b16 %v286
        %v428 = vunpack.c.h.b16 %v286
        %v429 = vunpack.c.l.b16 %v287
        %v430 = vunpack.c.h.b16 %v287
        %v431 = vunpack.c.l.b16 %v288
        %v432 = vunpack.c.h.b16 %v288
        %v433 = vunpack.c.l.b16 %v289
        %v434 = vunpack.c.h.b16 %v289
        %v435 = vunpack.c.l.b16 %v290
        %v436 = vunpack.c.h.b16 %v290
        %v437 = vunpack.c.l.b16 %v291
        %v438 = vunpack.c.h.b16 %v291
        %v439 = vunpack.c.l.b16 %v292
        %v440 = vunpack.c.h.b16 %v292
        %v441 = vunpack.c.l.b16 %v293
        %v442 = vunpack.c.h.b16 %v293
        %v443 = vunpack.c.l.b16 %v294
        %v444 = vunpack.c.h.b16 %v294
        %v445 = vunpack.c.l.b16 %v295
        %v446 = vunpack.c.h.b16 %v295
        %v447 = vunpack.c.l.b16 %v296
        %v448 = vunpack.c.h.b16 %v296
        %v449 = vunpack.c.l.b16 %v297
        %v450 = vunpack.c.h.b16 %v297
        %v451 = vunpack.c.l.b16 %v298
        %v452 = vunpack.c.h.b16 %v298
        %v453 = vunpack.c.l.b16 %v299
        %v454 = vunpack.c.h.b16 %v299
        %v455 = vunpack.c.l.b16 %v300
        %v456 = vunpack.c.h.b16 %v300
        %v457 = vunpack.c.l.b16 %v301
        %v458 = vunpack.c.h.b16 %v301
        %v459 = vunpack.c.l.b16 %v302
        %v460 = vunpack.c.h.b16 %v302
        %v461 = vunpack.c.l.b16 %v303
        %v462 = vunpack.c.h.b16 %v303
        %v463 = vunpack.c.l.b16 %v304
        %v464 = vunpack.c.h.b16 %v304
        %v465 = vunpack.c.l.b16 %v305
        %v466 = vunpack.c.h.b16 %v305
        %v467 = vunpack.c.l.b16 %v306
        %v468 = vunpack.c.h.b16 %v306
        %v469 = vunpack.c.l.b16 %v307
        %v470 = vunpack.c.h.b16 %v307
        %v471 = vunpack.c.l.b16 %v308
        %v472 = vunpack.c.h.b16 %v308
        %v473 = vunpack.c.l.b16 %v309
        %v474 = vunpack.c.h.b16 %v309
        %v475 = vunpack.c.l.b16 %v310
        %v476 = vunpack.c.h.b16 %v310
        %v477 = vunpack.c.l.b16 %v311
        %v478 = vunpack.c.h.b16 %v311
        %v479 = vunpack.c.l.b16 %v312
        %v480 = vunpack.c.h.b16 %v312
        %v481 = vunpack.c.l.b16 %v313
        %v482 = vunpack.c.h.b16 %v313
        %v483 = vunpack.c.l.b16 %v314
        %v484 = vunpack.c.h.b16 %v314
        %v485 = vunpack.c.l.b16 %v315
        %v486 = vunpack.c.h.b16 %v315
        %v487 = vunpack.c.l.b16 %v316
        %v488 = vunpack.c.h.b16 %v316
        %v489 = vunpack.c.l.b16 %v317
        %v490 = vunpack.c.h.b16 %v317
        %v491 = vunpack.c.l.b16 %v318
        %v492 = vunpack.c.h.b16 %v318
        %v493 = vunpack.c.l.b16 %v319
        %v494 = vunpack.c.h.b16 %v319
        %v495 = vunpack.c.l.b16 %v320
        %v496 = vunpack.c.h.b16 %v320
        %v497 = vunpack.c.l.b16 %v321
        %v498 = vunpack.c.h.b16 %v321
        %v499 = vunpack.c.l.b16 %v322
        %v500 = vunpack.c.h.b16 %v322
        %v501 = vunpack.c.l.b16 %v323
        %v502 = vunpack.c.h.b16 %v323
        %v503 = vunpack.c.l.b16 %v324
        %v504 = vunpack.c.h.b16 %v324
        %v505 = vunpack.c.l.b16 %v325
        %v506 = vunpack.c.h.b16 %v325
        %v507 = vunpack.c.l.b16 %v326
        %v508 = vunpack.c.h.b16 %v326
        %v509 = vunpack.c.l.b16 %v327
        %v510 = vunpack.c.h.b16 %v327
        %v511 = vunpack.c.l.b16 %v328
        %v512 = vunpack.c.h.b16 %v328
        %v513 = vunpack.c.l.b16 %v329
        %v514 = vunpack.c.h.b16 %v329
        %v515 = vunpack.c.l.b16 %v330
        %v516 = vunpack.c.h.b16 %v330
        %v517 = vunpack.c.l.b16 %v331
        %v518 = vunpack.c.h.b16 %v331
        %v519 = vunpack.c.l.b16 %v332
        %v520 = vunpack.c.h.b16 %v332
        %v521 = vunpack.c.l.b16 %v333
        %v522 = vunpack.c.h.b16 %v333
        %v523 = vunpack.c.l.b16 %v334
        %v524 = vunpack.c.h.b16 %v334
        %v525 = vunpack.c.l.b16 %v335
        %v526 = vunpack.c.h.b16 %v335
        %v527 = vunpack.c.l.b16 %v336
        %v528 = vunpack.c.h.b16 %v336
        %v529 = vpack.c.b16 %v405, %v401
        %v530 = vpack.c.b16 %v406, %v402
        %v531 = vpack.c.b16 %v407, %v403
        %v532 = vpack.c.b16 %v408, %v404
        %v533 = vpack.c.b16 %v413, %v409
        %v534 = vpack.c.b16 %v414, %v410
        %v535 = vpack.c.b16 %v415, %v411
        %v536 = vpack.c.b16 %v416, %v412
        %v537 = vpack.c.b16 %v421, %v417
        %v538 = vpack.c.b16 %v422, %v418
        %v539 = vpack.c.b16 %v423, %v419
        %v540 = vpack.c.b16 %v424, %v420
        %v541 = vpack.c.b16 %v429, %v425
        %v542 = vpack.c.b16 %v430, %v426
        %v543 = vpack.c.b16 %v431, %v427
        %v544 = vpack.c.b16 %v432, %v428
        %v545 = vpack.c.b16 %v437, %v433
        %v546 = vpack.c.b16 %v438, %v434
        %v547 = vpack.c.b16 %v439, %v435
        %v548 = vpack.c.b16 %v440, %v436
        %v549 = vpack.c.b16 %v445, %v441
        %v550 = vpack.c.b16 %v446, %v442
        %v551 = vpack.c.b16 %v447, %v443
        %v552 = vpack.c.b16 %v448, %v444
        %v553 = vpack.c.b16 %v453, %v449
        %v554 = vpack.c.b16 %v454, %v450
        %v555 = vpack.c.b16 %v455, %v451
        %v556 = vpack.c.b16 %v456, %v452
        %v557 = vpack.c.b16 %v461, %v457
        %v558 = vpack.c.b16 %v462, %v458
        %v559 = vpack.c.b16 %v463, %v459
        %v560 = vpack.c.b16 %v464, %v460
        %v561 = vpack.c.b16 %v469, %v465
        %v562 = vpack.c.b16 %v470, %v466
        %v563 = vpack.c.b16 %v471, %v467
        %v564 = vpack.c.b16 %v472, %v468
        %v565 = vpack.c.b16 %v477, %v473
        %v566 = vpack.c.b16 %v478, %v474
        %v567 = vpack.c.b16 %v479, %v475
        %v568 = vpack.c.b16 %v480, %v476
        %v569 = vpack.c.b16 %v485, %v481
        %v570 = vpack.c.b16 %v486, %v482
        %v571 = vpack.c.b16 %v487, %v483
        %v572 = vpack.c.b16 %v488, %v484
        %v573 = vpack.c.b16 %v493, %v489
        %v574 = vpack.c.b16 %v494, %v490
        %v575 = vpack.c.b16 %v495, %v491
        %v576 = vpack.c.b16 %v496, %v492
        %v577 = vpack.c.b16 %v501, %v497
        %v578 = vpack.c.b16 %v502, %v498
        %v579 = vpack.c.b16 %v503, %v499
        %v580 = vpack.c.b16 %v504, %v500
        %v581 = vpack.c.b16 %v509, %v505
        %v582 = vpack.c.b16 %v510, %v506
        %v583 = vpack.c.b16 %v511, %v507
        %v584 = vpack.c.b16 %v512, %v508
        %v585 = vpack.c.b16 %v517, %v513
        %v586 = vpack.c.b16 %v518, %v514
        %v587 = vpack.c.b16 %v519, %v515
        %v588 = vpack.c.b16 %v520, %v516
        %v589 = vpack.c.b16 %v525, %v521
        %v590 = vpack.c.b16 %v526, %v522
        %v591 = vpack.c.b16 %v527, %v523
        %v592 = vpack.c.b16 %v528, %v524
        %657 = vmatpush.bf16.msra.mxu0 %v557
        %658 = vmatpush.bf16.msra.mxu0 %v553
        %659 = vmatpush.bf16.msra.mxu0 %v549
        %660 = vmatpush.bf16.msra.mxu0 %v545
        %661 = vmatpush.bf16.msra.mxu0 %v541
        %662 = vmatpush.bf16.msra.mxu0 %v537
        %663 = vmatpush.bf16.msra.mxu0 %v533
        %664 = vmatpush.bf16.msra.mxu0 %v529
        %665 = vmatmul.bf16.gmra.mxu0 %v271
        %v666 = vpop.f32.mrf.mxu0
        %v667 = vadd.f32 0.0, %v666
        %v668 = vpop.f32.mrf.mxu0
        %669 = vdwg.mxu0
        %670 = vmatpush.bf16.msra.mxu0 %v589
        %671 = vmatpush.bf16.msra.mxu0 %v585
        %672 = vmatpush.bf16.msra.mxu0 %v581
        %673 = vmatpush.bf16.msra.mxu0 %v577
        %674 = vmatpush.bf16.msra.mxu0 %v573
        %675 = vmatpush.bf16.msra.mxu0 %v569
        %676 = vmatpush.bf16.msra.mxu0 %v565
        %677 = vmatpush.bf16.msra.mxu0 %v561
        %678 = vmatmul.bf16.gmra.mxu0 %v272
        %v679 = vpop.f32.mrf.mxu0
        %v680 = vadd.f32 %v667, %v679
        %v681 = vpop.f32.mrf.mxu0
        %682 = vdwg.mxu0
        %683 = vmatpush.bf16.msra.mxu0 %v558
        %684 = vmatpush.bf16.msra.mxu0 %v554
        %685 = vmatpush.bf16.msra.mxu0 %v550
        %686 = vmatpush.bf16.msra.mxu0 %v546
        %687 = vmatpush.bf16.msra.mxu0 %v542
        %688 = vmatpush.bf16.msra.mxu0 %v538
        %689 = vmatpush.bf16.msra.mxu0 %v534
        %690 = vmatpush.bf16.msra.mxu0 %v530
        %691 = vmatmul.bf16.gmra.mxu0 %v271
        %v692 = vpop.f32.mrf.mxu0
        %v693 = vadd.f32 0.0, %v692
        %v694 = vpop.f32.mrf.mxu0
        %695 = vdwg.mxu0
        %696 = vmatpush.bf16.msra.mxu0 %v590
        %697 = vmatpush.bf16.msra.mxu0 %v586
        %698 = vmatpush.bf16.msra.mxu0 %v582
        %699 = vmatpush.bf16.msra.mxu0 %v578
        %700 = vmatpush.bf16.msra.mxu0 %v574
        %701 = vmatpush.bf16.msra.mxu0 %v570
        %702 = vmatpush.bf16.msra.mxu0 %v566
        %703 = vmatpush.bf16.msra.mxu0 %v562
        %704 = vmatmul.bf16.gmra.mxu0 %v272
        %v705 = vpop.f32.mrf.mxu0
        %v706 = vadd.f32 %v693, %v705
        %v707 = vpop.f32.mrf.mxu0
        %708 = vdwg.mxu0
        %709 = vmatpush.bf16.msra.mxu0 %v559
        %710 = vmatpush.bf16.msra.mxu0 %v555
        %711 = vmatpush.bf16.msra.mxu0 %v551
        %712 = vmatpush.bf16.msra.mxu0 %v547
        %713 = vmatpush.bf16.msra.mxu0 %v543
        %714 = vmatpush.bf16.msra.mxu0 %v539
        %715 = vmatpush.bf16.msra.mxu0 %v535
        %716 = vmatpush.bf16.msra.mxu0 %v531
        %717 = vmatmul.bf16.gmra.mxu0 %v271
        %v718 = vpop.f32.mrf.mxu0
        %v719 = vadd.f32 0.0, %v718
        %v720 = vpop.f32.mrf.mxu0
        %721 = vdwg.mxu0
        %722 = vmatpush.bf16.msra.mxu0 %v591
        %723 = vmatpush.bf16.msra.mxu0 %v587
        %724 = vmatpush.bf16.msra.mxu0 %v583
        %725 = vmatpush.bf16.msra.mxu0 %v579
        %726 = vmatpush.bf16.msra.mxu0 %v575
        %727 = vmatpush.bf16.msra.mxu0 %v571
        %728 = vmatpush.bf16.msra.mxu0 %v567
        %729 = vmatpush.bf16.msra.mxu0 %v563
        %730 = vmatmul.bf16.gmra.mxu0 %v272
        %v731 = vpop.f32.mrf.mxu0
        %v732 = vadd.f32 %v719, %v731
        %v733 = vpop.f32.mrf.mxu0
        %734 = vdwg.mxu0
        %735 = vmatpush.bf16.msra.mxu0 %v560
        %736 = vmatpush.bf16.msra.mxu0 %v556
        %737 = vmatpush.bf16.msra.mxu0 %v552
        %738 = vmatpush.bf16.msra.mxu0 %v548
        %739 = vmatpush.bf16.msra.mxu0 %v544
        %740 = vmatpush.bf16.msra.mxu0 %v540
        %741 = vmatpush.bf16.msra.mxu0 %v536
        %742 = vmatpush.bf16.msra.mxu0 %v532
        %743 = vmatmul.bf16.gmra.mxu0 %v271
        %v744 = vpop.f32.mrf.mxu0
        %v745 = vadd.f32 0.0, %v744
        %v746 = vpop.f32.mrf.mxu0
        %747 = vdwg.mxu0
        %748 = vmatpush.bf16.msra.mxu0 %v592
        %749 = vmatpush.bf16.msra.mxu0 %v588
        %750 = vmatpush.bf16.msra.mxu0 %v584
        %751 = vmatpush.bf16.msra.mxu0 %v580
        %752 = vmatpush.bf16.msra.mxu0 %v576
        %753 = vmatpush.bf16.msra.mxu0 %v572
        %754 = vmatpush.bf16.msra.mxu0 %v568
        %755 = vmatpush.bf16.msra.mxu0 %v564
        %756 = vmatmul.bf16.gmra.mxu0 %v272
        %v757 = vpop.f32.mrf.mxu0
        %v758 = vadd.f32 %v745, %v757
        %v759 = vpop.f32.mrf.mxu0
        %760 = vdwg.mxu0
        %761 = vst [vmem:[%s219] sm:$0xff] %v680
        %762 = vst [vmem:[%s219 + $0x8] sm:$0xff] %v706
        %763 = vst [vmem:[%s219 + $0x10] sm:$0xff] %v732
        %764 = vst [vmem:[%s219 + $0x18] sm:$0xff] %v758
        %s765 = sand.u32 %s95, 1
        %s766 = scalar_lea.sflag [#allocation4], %s765
        %s767 = sand.u32 %s95, 1
        %s768 = smul.addr %s767, 32
        %s769 = scalar_lea.vmem [#allocation8], %s768
        // Predicated region
        $region45: #{tpu_custom_call.1} parent=31 // pred_check
          %p770 = pneg %p105
        $region46: #{tpu_custom_call.1} parent=31 // pred_check_branch
          %772 = sbr.rel (%p770) target = $region48
        $region47: #{tpu_custom_call.1} parent=31 // pred_region
          %s773 = smul.u32 4, %s19
          %775 = vsyncadd %s766, 0
          %s776 = smul.addr %s773, 8
          %s777 = scalar_lea.hbm %s3, %s776
          %s779 = sshll.u32 %s769, 4
          %s780 = int_to_ptr.vmem [resolvable:$true] %s779
          %s781 = sshll.u32 %s777, 4
          %s782 = int_to_ptr.hbm [resolvable:$true] %s781
          %784 = dma.vmem_to_hbm [thread:$0]  %s780, 512, %s782, %s766
        $region48: #{tpu_custom_call.1} parent=31 // pred_fallthru
          _
      $region32: #{tpu_custom_call.1} parent=5 // pred_fallthru
        _
      %p785 = scmp.le.s32.totalorder 2, %s14
      // Predicated region
      $region49: #{tpu_custom_call.1} parent=5 // pred_check
        %p786 = pneg %p785
      $region50: #{tpu_custom_call.1} parent=5 // pred_check_branch
        %788 = sbr.rel (%p786) target = $region52
      $region51: #{tpu_custom_call.1} parent=5 // pred_region
        %s789 = ssub.s32 %s14, 2
        // Predicated region
        $region53: #{tpu_custom_call.1} parent=51 // pred_check
          %p790 = pneg %p111
        $region54: #{tpu_custom_call.1} parent=51 // pred_check_branch
          %792 = sbr.rel (%p790) target = $region56
        $region55: #{tpu_custom_call.1} parent=51 // pred_region
          %s793 = sand.u32 %s96, 1
          %s794 = scalar_lea.sflag [#allocation4], %s793
          %s795 = sand.u32 %s96, 1
          %s796 = smul.addr %s795, 32
          %s797 = scalar_lea.vmem [#allocation8], %s796
          %799 = dma.done %s794, 512
        $region56: #{tpu_custom_call.1} parent=51 // pred_fallthru
          _
      $region52: #{tpu_custom_call.1} parent=5 // pred_fallthru
        _
    $region6: #{tpu_custom_call.1} parent=1 // loop_footer
      %s18 = sadd.s32 1, %s14
    $region7: #{tpu_custom_call.1} parent=1 // loop_footer_branch
      %13 = sbr.rel target = $region3
    $region8: #{tpu_custom_call.1} parent=1 // loop_exit
      _
    %800 = vsyncpa [#allocation3], 1
    %s801 = scalar_lea.sflag [#allocation3], 1
    %802 = vsyncpa %s801, 1
    %803 = vsyncpa [#allocation6], 1
    %804 = vsyncpa [#allocation4], 1
    %s805 = scalar_lea.sflag [#allocation4], 1
    %806 = vsyncpa %s805, 1

// kernel: tpu_custom_call.1
$region0: #{tpu_custom_call.1}
  #allocation0 [shape = 'u32[]', space=smem, size = 0x4, offset = 0x4, fixed_abs, tag = 'smem constant byte address 0x4 - core index']
  #allocation1 [shape = 'u32[72,128]{1,0:T(1,128)}', space=vmem, size = 0x9000, scoped, tag = 'internal scratch']
  %s0 = inlined_call_operand.hbm [shape: f32[16,256], index: 0, kind: input, shape index: {}]
  %s1 = inlined_call_operand.hbm [shape: f32[8,16], index: 1, kind: input, shape index: {}]
  %s2 = inlined_call_operand.hbm [shape: bf16[256,1024], index: 2, kind: input, shape index: {}]
  %s3 = inlined_call_operand.hbm [shape: f32[8,1024], index: 3, kind: output, shape index: {}]
  %s4 = sld [smem:[#allocation0]]
  $region57: #{tpu_custom_call.1} parent=0
    _
  %s6 = ssub.s32 1, %s4
  %s7 = scalar_select 0, %s6, %s4
  $region1: #{tpu_custom_call.1} parent=0
    #allocation2 [shape = 'u8[16384]{0}', space=vmem, size = 0x4000, scoped, tag = 'input window, operand 0, single buffered']
    #allocation3 [shape = 's32[2]{0}', space=sflag, size = 0x8, scoped, tag = 'scoped memory for tpu_custom_call.1']
    #allocation4 [shape = 's32[2]{0}', space=sflag, size = 0x8, scoped, tag = 'scoped memory for tpu_custom_call.1']
    #allocation5 [shape = 'u8[4096]{0}', space=vmem, size = 0x1000, scoped, tag = 'input window, operand 1, single buffered']
    #allocation6 [shape = 's32[1]{0}', space=sflag, size = 0x4, scoped, tag = 'scoped memory for tpu_custom_call.1']
    #allocation7 [shape = 'u8[524288]{0}', space=vmem, size = 0x80000, scoped, tag = 'input window, operand 2']
    #allocation8 [shape = 'u8[32768]{0}', space=vmem, size = 0x8000, scoped, tag = 'output window, operand 0']
    %8 = vsyncpa [#allocation3], 0
    %9 = vsyncpa [#allocation6], 0
    %10 = vsyncpa [#allocation4], 0
    %s11 = scalar_lea.sflag [#allocation4], 1
    %12 = vsyncpa %s11, 0
    loop: start=0, step=1, limit=4
    $region2: #{tpu_custom_call.1} parent=1 // loop_pre_header
      _
    $region3: #{tpu_custom_call.1} parent=1 // loop_header
      %s14 = sphi 0, %s18
      %p15 = scmp.ge.s32.totalorder %s14, 4
      %s22 = sphi 0, %s22
      %s24 = sphi 0, %s22
      %s25 = sphi 0, %s24
      %s39 = sphi 0, %s25
      %s43 = sphi 0, %s43
      %s45 = sphi 0, %s43
      %s46 = sphi 0, %s45
      %s60 = sphi 0, %s46
      %s66 = sphi 0, %s68
      %s69 = sphi 0, %s66
      %s70 = sphi 0, %s69
      %s86 = sphi 0, %s70
      %s92 = sphi 0, %s94
      %s95 = sphi 0, %s92
      %s96 = sphi 0, %s95
      %s112 = sphi 0, %s96
    $region4: #{tpu_custom_call.1} parent=1 // loop_header_branch
      %17 = sbr.rel (%p15) target = $region8
    $region5: #{tpu_custom_call.1} parent=1 // loop_body
      %s19 = ssub.s32 %s14, 1
      %s20 = ssub.s32 %s14, 2
      %s21 = sadd.s32 %s14, 1
      %s23 = sadd.s32 %s22, 1
      %p26 = scmp.eq.s32.totalorder %s14, 1
      %p27 = scmp.ne.s32.totalorder %s22, %s24
      %p28 = scmp.eq.s32.totalorder %s14, 0
      %p29 = por %p27, %p28
      %p30 = scmp.ne.s32.totalorder %s22, %s24
      %p31 = scmp.eq.s32.totalorder %s19, 1
      %p32 = por %p30, %p31
      %p33 = scmp.ne.s32.totalorder %s24, %s25
      %p34 = scmp.eq.s32.totalorder %s19, 0
      %p35 = por %p33, %p34
      %p36 = scmp.ne.s32.totalorder %s24, %s25
      %p37 = scmp.eq.s32.totalorder %s20, 1
      %p38 = por %p36, %p37
      %p40 = scmp.ne.s32.totalorder %s25, %s39
      %p41 = scmp.eq.s32.totalorder %s20, 0
      %p42 = por %p40, %p41
      %s44 = sadd.s32 %s43, 1
      %p47 = scmp.eq.s32.totalorder %s14, 1
      %p48 = scmp.ne.s32.totalorder %s43, %s45
      %p49 = scmp.eq.s32.totalorder %s14, 0
      %p50 = por %p48, %p49
      %p51 = scmp.ne.s32.totalorder %s43, %s45
      %p52 = scmp.eq.s32.totalorder %s19, 1
      %p53 = por %p51, %p52
      %p54 = scmp.ne.s32.totalorder %s45, %s46
      %p55 = scmp.eq.s32.totalorder %s19, 0
      %p56 = por %p54, %p55
      %p57 = scmp.ne.s32.totalorder %s45, %s46
      %p58 = scmp.eq.s32.totalorder %s20, 1
      %p59 = por %p57, %p58
      %p61 = scmp.ne.s32.totalorder %s46, %s60
      %p62 = scmp.eq.s32.totalorder %s20, 0
      %p63 = por %p61, %p62
      %s64 = ssub.s32 %s14, %s21
      %p65 = scmp.eq.s32.totalorder %s64, 0
      %s67 = sadd.s32 %s66, 1
      %s68 = scalar_select %p65, %s66, %s67
      %p71 = pneg %p65
      %p72 = scmp.eq.s32.totalorder %s14, 1
      %p73 = por %p71, %p72
      %p74 = scmp.ne.s32.totalorder %s66, %s69
      %p75 = scmp.eq.s32.totalorder %s14, 0
      %p76 = por %p74, %p75
      %p77 = scmp.ne.s32.totalorder %s66, %s69
      %p78 = scmp.eq.s32.totalorder %s19, 1
      %p79 = por %p77, %p78
      %p80 = scmp.ne.s32.totalorder %s69, %s70
      %p81 = scmp.eq.s32.totalorder %s19, 0
      %p82 = por %p80, %p81
      %p83 = scmp.ne.s32.totalorder %s69, %s70
      %p84 = scmp.eq.s32.totalorder %s20, 1
      %p85 = por %p83, %p84
      %p87 = scmp.ne.s32.totalorder %s70, %s86
      %p88 = scmp.eq.s32.totalorder %s20, 0
      %p89 = por %p87, %p88
      %s90 = ssub.s32 %s14, %s21
      %p91 = scmp.eq.s32.totalorder %s90, 0
      %s93 = sadd.s32 %s92, 1
      %s94 = scalar_select %p91, %s92, %s93
      %p97 = pneg %p91
      %p98 = scmp.eq.s32.totalorder %s14, 1
      %p99 = por %p97, %p98
      %p100 = scmp.ne.s32.totalorder %s92, %s95
      %p101 = scmp.eq.s32.totalorder %s14, 0
      %p102 = por %p100, %p101
      %p103 = scmp.ne.s32.totalorder %s92, %s95
      %p104 = scmp.eq.s32.totalorder %s19, 1
      %p105 = por %p103, %p104
      %p106 = scmp.ne.s32.totalorder %s95, %s96
      %p107 = scmp.eq.s32.totalorder %s19, 0
      %p108 = por %p106, %p107
      %p109 = scmp.ne.s32.totalorder %s95, %s96
      %p110 = scmp.eq.s32.totalorder %s20, 1
      %p111 = por %p109, %p110
      %p113 = scmp.ne.s32.totalorder %s96, %s112
      %p114 = scmp.eq.s32.totalorder %s20, 0
      %p115 = por %p113, %p114
      %p116 = scmp.le.s32.totalorder 1, %s14
      %p117 = scmp.lt.s32.totalorder %s14, 3
      %p118 = pnand %p116, %p117
      %p119 = pneg %p118
      // Predicated region
      $region9: #{tpu_custom_call.1} parent=5 // pred_check
        _
      $region10: #{tpu_custom_call.1} parent=5 // pred_check_branch
        %121 = sbr.rel (%p118) target = $region12
      $region11: #{tpu_custom_call.1} parent=5 // pred_region
        %s122 = ssub.s32 %s14, 1
        // Predicated region
        $region13: #{tpu_custom_call.1} parent=11 // pred_check
          %p123 = pneg %p35
        $region14: #{tpu_custom_call.1} parent=11 // pred_check_branch
          %125 = sbr.rel (%p123) target = $region16
        $region15: #{tpu_custom_call.1} parent=11 // pred_region
          %127 = vsyncadd [#allocation3], 0
          %s128 = sshll.u32 %s0, 4
          %s129 = int_to_ptr.hbm [resolvable:$true] %s128
          %s130 = sshll.u32 [#allocation2], 4
          %s131 = int_to_ptr.vmem [resolvable:$true] %s130
          %136 = dma.hbm_to_vmem [thread:$0]  %s129, 512, %s131, [#allocation3], 256, 256, 16
        $region16: #{tpu_custom_call.1} parent=11 // pred_fallthru
          _
        // Predicated region
        $region17: #{tpu_custom_call.1} parent=11 // pred_check
          %p137 = pneg %p56
        $region18: #{tpu_custom_call.1} parent=11 // pred_check_branch
          %139 = sbr.rel (%p137) target = $region20
        $region19: #{tpu_custom_call.1} parent=11 // pred_region
          %141 = vsyncadd [#allocation6], 0
          %s143 = sshll.u32 %s1, 4
          %s144 = int_to_ptr.hbm [resolvable:$true] %s143
          %s145 = sshll.u32 [#allocation5], 4
          %s146 = int_to_ptr.vmem [resolvable:$true] %s145
          %148 = dma.hbm_to_vmem [thread:$0]  %s144, 128, %s146, [#allocation6]
        $region20: #{tpu_custom_call.1} parent=11 // pred_fallthru
          _
      $region12: #{tpu_custom_call.1} parent=5 // pred_fallthru
        _
      %p149 = scmp.lt.s32.totalorder %s14, 2
      // Predicated region
      $region21: #{tpu_custom_call.1} parent=5 // pred_check
        %p150 = pneg %p149
      $region22: #{tpu_custom_call.1} parent=5 // pred_check_branch
        %152 = sbr.rel (%p150) target = $region24
      $region23: #{tpu_custom_call.1} parent=5 // pred_region
        // Predicated region
        $region25: #{tpu_custom_call.1} parent=23 // pred_check
          %p153 = pneg %p76
        $region26: #{tpu_custom_call.1} parent=23 // pred_check_branch
          %155 = sbr.rel (%p153) target = $region28
        $region27: #{tpu_custom_call.1} parent=23 // pred_region
          %s156 = sand.u32 %s14, 1
          %s157 = scalar_lea.sflag [#allocation3], %s156
          %s158 = sand.u32 %s66, 1
          %s159 = smul.addr %s158, 512
          %s160 = scalar_lea.vmem [#allocation7], %s159
          %s161 = smul.u32 4, %s14
          %163 = vsyncadd %s157, 0
          %s164 = smul.addr %s161, 4
          %s165 = scalar_lea.hbm %s2, %s164
          %s166 = sshll.u32 %s165, 4
          %s167 = int_to_ptr.hbm [resolvable:$true] %s166
          %s168 = sshll.u32 %s160, 4
          %s169 = int_to_ptr.vmem [resolvable:$true] %s168
          %174 = dma.hbm_to_vmem [thread:$0]  %s167, 8192, %s169, %s157, 512, 256, 16
        $region28: #{tpu_custom_call.1} parent=23 // pred_fallthru
          _
      $region24: #{tpu_custom_call.1} parent=5 // pred_fallthru
        _
      %p175 = scmp.le.s32.totalorder 1, %s14
      %p176 = scmp.lt.s32.totalorder %s14, 3
      %p177 = pnand %p175, %p176
      %p178 = pneg %p177
      // Predicated region
      $region29: #{tpu_custom_call.1} parent=5 // pred_check
        _
      $region30: #{tpu_custom_call.1} parent=5 // pred_check_branch
        %180 = sbr.rel (%p177) target = $region32
      $region31: #{tpu_custom_call.1} parent=5 // pred_region
        %s181 = ssub.s32 %s14, 1
        // Predicated region
        $region33: #{tpu_custom_call.1} parent=31 // pred_check
          %p182 = pneg %p35
        $region34: #{tpu_custom_call.1} parent=31 // pred_check_branch
          %184 = sbr.rel (%p182) target = $region36
        $region35: #{tpu_custom_call.1} parent=31 // pred_region
          %186 = dma.done [#allocation3], 512
        $region36: #{tpu_custom_call.1} parent=31 // pred_fallthru
          _
        // Predicated region
        $region37: #{tpu_custom_call.1} parent=31 // pred_check
          %p187 = pneg %p56
        $region38: #{tpu_custom_call.1} parent=31 // pred_check_branch
          %189 = sbr.rel (%p187) target = $region40
        $region39: #{tpu_custom_call.1} parent=31 // pred_region
          %191 = dma.done [#allocation6], 128
        $region40: #{tpu_custom_call.1} parent=31 // pred_fallthru
          _
        %s192 = sand.u32 %s19, 1
        %s193 = scalar_lea.sflag [#allocation3], %s192
        %s194 = sand.u32 %s69, 1
        %s195 = smul.addr %s194, 512
        %s196 = scalar_lea.vmem [#allocation7], %s195
        // Predicated region
        $region41: #{tpu_custom_call.1} parent=31 // pred_check
          %p197 = pneg %p82
        $region42: #{tpu_custom_call.1} parent=31 // pred_check_branch
          %199 = sbr.rel (%p197) target = $region44
        $region43: #{tpu_custom_call.1} parent=31 // pred_region
          %201 = dma.done %s193, 8192
        $region44: #{tpu_custom_call.1} parent=31 // pred_fallthru
          _
        %p202 = pneg %p35
        %p203 = pneg %p32
        %p204 = pneg %p56
        %p205 = pneg %p53
        %s206 = sand.u32 %s19, 1
        %s207 = scalar_lea.sflag [#allocation3], %s206
        %s208 = sand.u32 %s69, 1
        %s209 = smul.addr %s208, 512
        %s210 = scalar_lea.vmem [#allocation7], %s209
        %p211 = pneg %p82
        %p212 = pneg %p79
        %p213 = pneg %p108
        %p214 = pneg %p105
        %s215 = sand.u32 %s95, 1
        %s216 = scalar_lea.sflag [#allocation4], %s215
        %s217 = sand.u32 %s95, 1
        %s218 = smul.addr %s217, 32
        %s219 = scalar_lea.vmem [#allocation8], %s218
        %s220 = smul.u32 4, %s19
        %s221 = smul.u32 4, %s19
        %v222 = vld [vmem:[#allocation5] sm:$0xff]
        %v223 = vld [vmem:[#allocation2] sm:$0xff]
        %v224 = vld [vmem:[#allocation2 + $0x8] sm:$0xff]
        %v225 = vld [vmem:[#allocation2 + $0x10] sm:$0xff]
        %v226 = vld [vmem:[#allocation2 + $0x18] sm:$0xff]
        %vm227 = vcmask 130048
        %v229 = vsel %vm227, %v222, 0
        %231 = vmatpush.msra.mxu0 0.0
        %232 = vmatpush.msra.mxu0 0.0
        %233 = vmatpush.msra.mxu0 0.0
        %234 = vmatpush.msra.mxu0 0.0
        %235 = vmatpush.msra.mxu0 0.0
        %236 = vmatpush.msra.mxu0 0.0
        %237 = vmatpush.msra.mxu0 0.0
        %238 = vmatpush.msra.mxu0 0.0
        %239 = vmatpush.msra.mxu0 0.0
        %240 = vmatpush.msra.mxu0 0.0
        %241 = vmatpush.msra.mxu0 0.0
        %242 = vmatpush.msra.mxu0 0.0
        %243 = vmatpush.msra.mxu0 0.0
        %244 = vmatpush.msra.mxu0 0.0
        %245 = vmatpush.msra.mxu0 %v225
        %246 = vmatpush.msra.mxu0 %v223
        %247 = vmatmul.f32.gmra.mxu0 %v229
        %v248 = vpop.f32.mrf.mxu0
        %v249 = vadd.f32 0.0, %v248
        %250 = vdwg.mxu0
        %251 = vmatpush.msra.mxu0 0.0
        %252 = vmatpush.msra.mxu0 0.0
        %253 = vmatpush.msra.mxu0 0.0
        %254 = vmatpush.msra.mxu0 0.0
        %255 = vmatpush.msra.mxu0 0.0
        %256 = vmatpush.msra.mxu0 0.0
        %257 = vmatpush.msra.mxu0 0.0
        %258 = vmatpush.msra.mxu0 0.0
        %259 = vmatpush.msra.mxu0 0.0
        %260 = vmatpush.msra.mxu0 0.0
        %261 = vmatpush.msra.mxu0 0.0
        %262 = vmatpush.msra.mxu0 0.0
        %263 = vmatpush.msra.mxu0 0.0
        %264 = vmatpush.msra.mxu0 0.0
        %265 = vmatpush.msra.mxu0 %v226
        %266 = vmatpush.msra.mxu0 %v224
        %267 = vmatmul.f32.gmra.mxu0 %v229
        %v268 = vpop.f32.mrf.mxu0
        %v269 = vadd.f32 0.0, %v268
        %270 = vdwg.mxu0
        %v271 = vpack.c.bf16 %v249, %v249
        %v272 = vpack.c.bf16 %v269, %v269
        %v273 = vld [vmem:[%s196] sm:$0xff]
        %v274 = vld [vmem:[%s196 + $0x8] sm:$0xff]
        %v275 = vld [vmem:[%s196 + $0x10] sm:$0xff]
        %v276 = vld [vmem:[%s196 + $0x18] sm:$0xff]
        %v277 = vld [vmem:[%s196 + $0x20] sm:$0xff]
        %v278 = vld [vmem:[%s196 + $0x28] sm:$0xff]
        %v279 = vld [vmem:[%s196 + $0x30] sm:$0xff]
        %v280 = vld [vmem:[%s196 + $0x38] sm:$0xff]
        %v281 = vld [vmem:[%s196 + $0x40] sm:$0xff]
        %v282 = vld [vmem:[%s196 + $0x48] sm:$0xff]
        %v283 = vld [vmem:[%s196 + $0x50] sm:$0xff]
        %v284 = vld [vmem:[%s196 + $0x58] sm:$0xff]
        %v285 = vld [vmem:[%s196 + $0x60] sm:$0xff]
        %v286 = vld [vmem:[%s196 + $0x68] sm:$0xff]
        %v287 = vld [vmem:[%s196 + $0x70] sm:$0xff]
        %v288 = vld [vmem:[%s196 + $0x78] sm:$0xff]
        %v289 = vld [vmem:[%s196 + $0x80] sm:$0xff]
        %v290 = vld [vmem:[%s196 + $0x88] sm:$0xff]
        %v291 = vld [vmem:[%s196 + $0x90] sm:$0xff]
        %v292 = vld [vmem:[%s196 + $0x98] sm:$0xff]
        %v293 = vld [vmem:[%s196 + $0xa0] sm:$0xff]
        %v294 = vld [vmem:[%s196 + $0xa8] sm:$0xff]
        %v295 = vld [vmem:[%s196 + $0xb0] sm:$0xff]
        %v296 = vld [vmem:[%s196 + $0xb8] sm:$0xff]
        %v297 = vld [vmem:[%s196 + $0xc0] sm:$0xff]
        %v298 = vld [vmem:[%s196 + $0xc8] sm:$0xff]
        %v299 = vld [vmem:[%s196 + $0xd0] sm:$0xff]
        %v300 = vld [vmem:[%s196 + $0xd8] sm:$0xff]
        %v301 = vld [vmem:[%s196 + $0xe0] sm:$0xff]
        %v302 = vld [vmem:[%s196 + $0xe8] sm:$0xff]
        %v303 = vld [vmem:[%s196 + $0xf0] sm:$0xff]
        %v304 = vld [vmem:[%s196 + $0xf8] sm:$0xff]
        %v305 = vld [vmem:[%s196 + $0x100] sm:$0xff]
        %v306 = vld [vmem:[%s196 + $0x108] sm:$0xff]
        %v307 = vld [vmem:[%s196 + $0x110] sm:$0xff]
        %v308 = vld [vmem:[%s196 + $0x118] sm:$0xff]
        %v309 = vld [vmem:[%s196 + $0x120] sm:$0xff]
        %v310 = vld [vmem:[%s196 + $0x128] sm:$0xff]
        %v311 = vld [vmem:[%s196 + $0x130] sm:$0xff]
        %v312 = vld [vmem:[%s196 + $0x138] sm:$0xff]
        %v313 = vld [vmem:[%s196 + $0x140] sm:$0xff]
        %v314 = vld [vmem:[%s196 + $0x148] sm:$0xff]
        %v315 = vld [vmem:[%s196 + $0x150] sm:$0xff]
        %v316 = vld [vmem:[%s196 + $0x158] sm:$0xff]
        %v317 = vld [vmem:[%s196 + $0x160] sm:$0xff]
        %v318 = vld [vmem:[%s196 + $0x168] sm:$0xff]
        %v319 = vld [vmem:[%s196 + $0x170] sm:$0xff]
        %v320 = vld [vmem:[%s196 + $0x178] sm:$0xff]
        %v321 = vld [vmem:[%s196 + $0x180] sm:$0xff]
        %v322 = vld [vmem:[%s196 + $0x188] sm:$0xff]
        %v323 = vld [vmem:[%s196 + $0x190] sm:$0xff]
        %v324 = vld [vmem:[%s196 + $0x198] sm:$0xff]
        %v325 = vld [vmem:[%s196 + $0x1a0] sm:$0xff]
        %v326 = vld [vmem:[%s196 + $0x1a8] sm:$0xff]
        %v327 = vld [vmem:[%s196 + $0x1b0] sm:$0xff]
        %v328 = vld [vmem:[%s196 + $0x1b8] sm:$0xff]
        %v329 = vld [vmem:[%s196 + $0x1c0] sm:$0xff]
        %v330 = vld [vmem:[%s196 + $0x1c8] sm:$0xff]
        %v331 = vld [vmem:[%s196 + $0x1d0] sm:$0xff]
        %v332 = vld [vmem:[%s196 + $0x1d8] sm:$0xff]
        %v333 = vld [vmem:[%s196 + $0x1e0] sm:$0xff]
        %v334 = vld [vmem:[%s196 + $0x1e8] sm:$0xff]
        %v335 = vld [vmem:[%s196 + $0x1f0] sm:$0xff]
        %v336 = vld [vmem:[%s196 + $0x1f8] sm:$0xff]
        %v401 = vunpack.c.l.b16 %v273
        %v402 = vunpack.c.h.b16 %v273
        %v403 = vunpack.c.l.b16 %v274
        %v404 = vunpack.c.h.b16 %v274
        %v405 = vunpack.c.l.b16 %v275
        %v406 = vunpack.c.h.b16 %v275
        %v407 = vunpack.c.l.b16 %v276
        %v408 = vunpack.c.h.b16 %v276
        %v409 = vunpack.c.l.b16 %v277
        %v410 = vunpack.c.h.b16 %v277
        %v411 = vunpack.c.l.b16 %v278
        %v412 = vunpack.c.h.b16 %v278
        %v413 = vunpack.c.l.b16 %v279
        %v414 = vunpack.c.h.b16 %v279
        %v415 = vunpack.c.l.b16 %v280
        %v416 = vunpack.c.h.b16 %v280
        %v417 = vunpack.c.l.b16 %v281
        %v418 = vunpack.c.h.b16 %v281
        %v419 = vunpack.c.l.b16 %v282
        %v420 = vunpack.c.h.b16 %v282
        %v421 = vunpack.c.l.b16 %v283
        %v422 = vunpack.c.h.b16 %v283
        %v423 = vunpack.c.l.b16 %v284
        %v424 = vunpack.c.h.b16 %v284
        %v425 = vunpack.c.l.b16 %v285
        %v426 = vunpack.c.h.b16 %v285
        %v427 = vunpack.c.l.b16 %v286
        %v428 = vunpack.c.h.b16 %v286
        %v429 = vunpack.c.l.b16 %v287
        %v430 = vunpack.c.h.b16 %v287
        %v431 = vunpack.c.l.b16 %v288
        %v432 = vunpack.c.h.b16 %v288
        %v433 = vunpack.c.l.b16 %v289
        %v434 = vunpack.c.h.b16 %v289
        %v435 = vunpack.c.l.b16 %v290
        %v436 = vunpack.c.h.b16 %v290
        %v437 = vunpack.c.l.b16 %v291
        %v438 = vunpack.c.h.b16 %v291
        %v439 = vunpack.c.l.b16 %v292
        %v440 = vunpack.c.h.b16 %v292
        %v441 = vunpack.c.l.b16 %v293
        %v442 = vunpack.c.h.b16 %v293
        %v443 = vunpack.c.l.b16 %v294
        %v444 = vunpack.c.h.b16 %v294
        %v445 = vunpack.c.l.b16 %v295
        %v446 = vunpack.c.h.b16 %v295
        %v447 = vunpack.c.l.b16 %v296
        %v448 = vunpack.c.h.b16 %v296
        %v449 = vunpack.c.l.b16 %v297
        %v450 = vunpack.c.h.b16 %v297
        %v451 = vunpack.c.l.b16 %v298
        %v452 = vunpack.c.h.b16 %v298
        %v453 = vunpack.c.l.b16 %v299
        %v454 = vunpack.c.h.b16 %v299
        %v455 = vunpack.c.l.b16 %v300
        %v456 = vunpack.c.h.b16 %v300
        %v457 = vunpack.c.l.b16 %v301
        %v458 = vunpack.c.h.b16 %v301
        %v459 = vunpack.c.l.b16 %v302
        %v460 = vunpack.c.h.b16 %v302
        %v461 = vunpack.c.l.b16 %v303
        %v462 = vunpack.c.h.b16 %v303
        %v463 = vunpack.c.l.b16 %v304
        %v464 = vunpack.c.h.b16 %v304
        %v465 = vunpack.c.l.b16 %v305
        %v466 = vunpack.c.h.b16 %v305
        %v467 = vunpack.c.l.b16 %v306
        %v468 = vunpack.c.h.b16 %v306
        %v469 = vunpack.c.l.b16 %v307
        %v470 = vunpack.c.h.b16 %v307
        %v471 = vunpack.c.l.b16 %v308
        %v472 = vunpack.c.h.b16 %v308
        %v473 = vunpack.c.l.b16 %v309
        %v474 = vunpack.c.h.b16 %v309
        %v475 = vunpack.c.l.b16 %v310
        %v476 = vunpack.c.h.b16 %v310
        %v477 = vunpack.c.l.b16 %v311
        %v478 = vunpack.c.h.b16 %v311
        %v479 = vunpack.c.l.b16 %v312
        %v480 = vunpack.c.h.b16 %v312
        %v481 = vunpack.c.l.b16 %v313
        %v482 = vunpack.c.h.b16 %v313
        %v483 = vunpack.c.l.b16 %v314
        %v484 = vunpack.c.h.b16 %v314
        %v485 = vunpack.c.l.b16 %v315
        %v486 = vunpack.c.h.b16 %v315
        %v487 = vunpack.c.l.b16 %v316
        %v488 = vunpack.c.h.b16 %v316
        %v489 = vunpack.c.l.b16 %v317
        %v490 = vunpack.c.h.b16 %v317
        %v491 = vunpack.c.l.b16 %v318
        %v492 = vunpack.c.h.b16 %v318
        %v493 = vunpack.c.l.b16 %v319
        %v494 = vunpack.c.h.b16 %v319
        %v495 = vunpack.c.l.b16 %v320
        %v496 = vunpack.c.h.b16 %v320
        %v497 = vunpack.c.l.b16 %v321
        %v498 = vunpack.c.h.b16 %v321
        %v499 = vunpack.c.l.b16 %v322
        %v500 = vunpack.c.h.b16 %v322
        %v501 = vunpack.c.l.b16 %v323
        %v502 = vunpack.c.h.b16 %v323
        %v503 = vunpack.c.l.b16 %v324
        %v504 = vunpack.c.h.b16 %v324
        %v505 = vunpack.c.l.b16 %v325
        %v506 = vunpack.c.h.b16 %v325
        %v507 = vunpack.c.l.b16 %v326
        %v508 = vunpack.c.h.b16 %v326
        %v509 = vunpack.c.l.b16 %v327
        %v510 = vunpack.c.h.b16 %v327
        %v511 = vunpack.c.l.b16 %v328
        %v512 = vunpack.c.h.b16 %v328
        %v513 = vunpack.c.l.b16 %v329
        %v514 = vunpack.c.h.b16 %v329
        %v515 = vunpack.c.l.b16 %v330
        %v516 = vunpack.c.h.b16 %v330
        %v517 = vunpack.c.l.b16 %v331
        %v518 = vunpack.c.h.b16 %v331
        %v519 = vunpack.c.l.b16 %v332
        %v520 = vunpack.c.h.b16 %v332
        %v521 = vunpack.c.l.b16 %v333
        %v522 = vunpack.c.h.b16 %v333
        %v523 = vunpack.c.l.b16 %v334
        %v524 = vunpack.c.h.b16 %v334
        %v525 = vunpack.c.l.b16 %v335
        %v526 = vunpack.c.h.b16 %v335
        %v527 = vunpack.c.l.b16 %v336
        %v528 = vunpack.c.h.b16 %v336
        %v529 = vpack.c.b16 %v405, %v401
        %v530 = vpack.c.b16 %v406, %v402
        %v531 = vpack.c.b16 %v407, %v403
        %v532 = vpack.c.b16 %v408, %v404
        %v533 = vpack.c.b16 %v413, %v409
        %v534 = vpack.c.b16 %v414, %v410
        %v535 = vpack.c.b16 %v415, %v411
        %v536 = vpack.c.b16 %v416, %v412
        %v537 = vpack.c.b16 %v421, %v417
        %v538 = vpack.c.b16 %v422, %v418
        %v539 = vpack.c.b16 %v423, %v419
        %v540 = vpack.c.b16 %v424, %v420
        %v541 = vpack.c.b16 %v429, %v425
        %v542 = vpack.c.b16 %v430, %v426
        %v543 = vpack.c.b16 %v431, %v427
        %v544 = vpack.c.b16 %v432, %v428
        %v545 = vpack.c.b16 %v437, %v433
        %v546 = vpack.c.b16 %v438, %v434
        %v547 = vpack.c.b16 %v439, %v435
        %v548 = vpack.c.b16 %v440, %v436
        %v549 = vpack.c.b16 %v445, %v441
        %v550 = vpack.c.b16 %v446, %v442
        %v551 = vpack.c.b16 %v447, %v443
        %v552 = vpack.c.b16 %v448, %v444
        %v553 = vpack.c.b16 %v453, %v449
        %v554 = vpack.c.b16 %v454, %v450
        %v555 = vpack.c.b16 %v455, %v451
        %v556 = vpack.c.b16 %v456, %v452
        %v557 = vpack.c.b16 %v461, %v457
        %v558 = vpack.c.b16 %v462, %v458
        %v559 = vpack.c.b16 %v463, %v459
        %v560 = vpack.c.b16 %v464, %v460
        %v561 = vpack.c.b16 %v469, %v465
        %v562 = vpack.c.b16 %v470, %v466
        %v563 = vpack.c.b16 %v471, %v467
        %v564 = vpack.c.b16 %v472, %v468
        %v565 = vpack.c.b16 %v477, %v473
        %v566 = vpack.c.b16 %v478, %v474
        %v567 = vpack.c.b16 %v479, %v475
        %v568 = vpack.c.b16 %v480, %v476
        %v569 = vpack.c.b16 %v485, %v481
        %v570 = vpack.c.b16 %v486, %v482
        %v571 = vpack.c.b16 %v487, %v483
        %v572 = vpack.c.b16 %v488, %v484
        %v573 = vpack.c.b16 %v493, %v489
        %v574 = vpack.c.b16 %v494, %v490
        %v575 = vpack.c.b16 %v495, %v491
        %v576 = vpack.c.b16 %v496, %v492
        %v577 = vpack.c.b16 %v501, %v497
        %v578 = vpack.c.b16 %v502, %v498
        %v579 = vpack.c.b16 %v503, %v499
        %v580 = vpack.c.b16 %v504, %v500
        %v581 = vpack.c.b16 %v509, %v505
        %v582 = vpack.c.b16 %v510, %v506
        %v583 = vpack.c.b16 %v511, %v507
        %v584 = vpack.c.b16 %v512, %v508
        %v585 = vpack.c.b16 %v517, %v513
        %v586 = vpack.c.b16 %v518, %v514
        %v587 = vpack.c.b16 %v519, %v515
        %v588 = vpack.c.b16 %v520, %v516
        %v589 = vpack.c.b16 %v525, %v521
        %v590 = vpack.c.b16 %v526, %v522
        %v591 = vpack.c.b16 %v527, %v523
        %v592 = vpack.c.b16 %v528, %v524
        %657 = vmatpush.bf16.msra.mxu0 %v557
        %658 = vmatpush.bf16.msra.mxu0 %v553
        %659 = vmatpush.bf16.msra.mxu0 %v549
        %660 = vmatpush.bf16.msra.mxu0 %v545
        %661 = vmatpush.bf16.msra.mxu0 %v541
        %662 = vmatpush.bf16.msra.mxu0 %v537
        %663 = vmatpush.bf16.msra.mxu0 %v533
        %664 = vmatpush.bf16.msra.mxu0 %v529
        %665 = vmatmul.bf16.gmra.mxu0 %v271
        %v666 = vpop.f32.mrf.mxu0
        %v667 = vadd.f32 0.0, %v666
        %v668 = vpop.f32.mrf.mxu0
        %669 = vdwg.mxu0
        %670 = vmatpush.bf16.msra.mxu0 %v589
        %671 = vmatpush.bf16.msra.mxu0 %v585
        %672 = vmatpush.bf16.msra.mxu0 %v581
        %673 = vmatpush.bf16.msra.mxu0 %v577
        %674 = vmatpush.bf16.msra.mxu0 %v573
        %675 = vmatpush.bf16.msra.mxu0 %v569
        %676 = vmatpush.bf16.msra.mxu0 %v565
        %677 = vmatpush.bf16.msra.mxu0 %v561
        %678 = vmatmul.bf16.gmra.mxu0 %v272
        %v679 = vpop.f32.mrf.mxu0
        %v680 = vadd.f32 %v667, %v679
        %v681 = vpop.f32.mrf.mxu0
        %682 = vdwg.mxu0
        %683 = vmatpush.bf16.msra.mxu0 %v558
        %684 = vmatpush.bf16.msra.mxu0 %v554
        %685 = vmatpush.bf16.msra.mxu0 %v550
        %686 = vmatpush.bf16.msra.mxu0 %v546
        %687 = vmatpush.bf16.msra.mxu0 %v542
        %688 = vmatpush.bf16.msra.mxu0 %v538
        %689 = vmatpush.bf16.msra.mxu0 %v534
        %690 = vmatpush.bf16.msra.mxu0 %v530
        %691 = vmatmul.bf16.gmra.mxu0 %v271
        %v692 = vpop.f32.mrf.mxu0
        %v693 = vadd.f32 0.0, %v692
        %v694 = vpop.f32.mrf.mxu0
        %695 = vdwg.mxu0
        %696 = vmatpush.bf16.msra.mxu0 %v590
        %697 = vmatpush.bf16.msra.mxu0 %v586
        %698 = vmatpush.bf16.msra.mxu0 %v582
        %699 = vmatpush.bf16.msra.mxu0 %v578
        %700 = vmatpush.bf16.msra.mxu0 %v574
        %701 = vmatpush.bf16.msra.mxu0 %v570
        %702 = vmatpush.bf16.msra.mxu0 %v566
        %703 = vmatpush.bf16.msra.mxu0 %v562
        %704 = vmatmul.bf16.gmra.mxu0 %v272
        %v705 = vpop.f32.mrf.mxu0
        %v706 = vadd.f32 %v693, %v705
        %v707 = vpop.f32.mrf.mxu0
        %708 = vdwg.mxu0
        %709 = vmatpush.bf16.msra.mxu0 %v559
        %710 = vmatpush.bf16.msra.mxu0 %v555
        %711 = vmatpush.bf16.msra.mxu0 %v551
        %712 = vmatpush.bf16.msra.mxu0 %v547
        %713 = vmatpush.bf16.msra.mxu0 %v543
        %714 = vmatpush.bf16.msra.mxu0 %v539
        %715 = vmatpush.bf16.msra.mxu0 %v535
        %716 = vmatpush.bf16.msra.mxu0 %v531
        %717 = vmatmul.bf16.gmra.mxu0 %v271
        %v718 = vpop.f32.mrf.mxu0
        %v719 = vadd.f32 0.0, %v718
        %v720 = vpop.f32.mrf.mxu0
        %721 = vdwg.mxu0
        %722 = vmatpush.bf16.msra.mxu0 %v591
        %723 = vmatpush.bf16.msra.mxu0 %v587
        %724 = vmatpush.bf16.msra.mxu0 %v583
        %725 = vmatpush.bf16.msra.mxu0 %v579
        %726 = vmatpush.bf16.msra.mxu0 %v575
        %727 = vmatpush.bf16.msra.mxu0 %v571
        %728 = vmatpush.bf16.msra.mxu0 %v567
        %729 = vmatpush.bf16.msra.mxu0 %v563
        %730 = vmatmul.bf16.gmra.mxu0 %v272
        %v731 = vpop.f32.mrf.mxu0
        %v732 = vadd.f32 %v719, %v731
        %v733 = vpop.f32.mrf.mxu0
        %734 = vdwg.mxu0
        %735 = vmatpush.bf16.msra.mxu0 %v560
        %736 = vmatpush.bf16.msra.mxu0 %v556
        %737 = vmatpush.bf16.msra.mxu0 %v552
        %738 = vmatpush.bf16.msra.mxu0 %v548
        %739 = vmatpush.bf16.msra.mxu0 %v544
        %740 = vmatpush.bf16.msra.mxu0 %v540
        %741 = vmatpush.bf16.msra.mxu0 %v536
        %742 = vmatpush.bf16.msra.mxu0 %v532
        %743 = vmatmul.bf16.gmra.mxu0 %v271
        %v744 = vpop.f32.mrf.mxu0
        %v745 = vadd.f32 0.0, %v744
        %v746 = vpop.f32.mrf.mxu0
        %747 = vdwg.mxu0
        %748 = vmatpush.bf16.msra.mxu0 %v592
        %749 = vmatpush.bf16.msra.mxu0 %v588
        %750 = vmatpush.bf16.msra.mxu0 %v584
        %751 = vmatpush.bf16.msra.mxu0 %v580
        %752 = vmatpush.bf16.msra.mxu0 %v576
        %753 = vmatpush.bf16.msra.mxu0 %v572
        %754 = vmatpush.bf16.msra.mxu0 %v568
        %755 = vmatpush.bf16.msra.mxu0 %v564
        %756 = vmatmul.bf16.gmra.mxu0 %v272
        %v757 = vpop.f32.mrf.mxu0
        %v758 = vadd.f32 %v745, %v757
        %v759 = vpop.f32.mrf.mxu0
        %760 = vdwg.mxu0
        %761 = vst [vmem:[%s219] sm:$0xff] %v680
        %762 = vst [vmem:[%s219 + $0x8] sm:$0xff] %v706
        %763 = vst [vmem:[%s219 + $0x10] sm:$0xff] %v732
        %764 = vst [vmem:[%s219 + $0x18] sm:$0xff] %v758
        %s765 = sand.u32 %s95, 1
        %s766 = scalar_lea.sflag [#allocation4], %s765
        %s767 = sand.u32 %s95, 1
        %s768 = smul.addr %s767, 32
        %s769 = scalar_lea.vmem [#allocation8], %s768
        // Predicated region
        $region45: #{tpu_custom_call.1} parent=31 // pred_check
          %p770 = pneg %p105
        $region46: #{tpu_custom_call.1} parent=31 // pred_check_branch
          %772 = sbr.rel (%p770) target = $region48
        $region47: #{tpu_custom_call.1} parent=31 // pred_region
          %s773 = smul.u32 4, %s19
          %775 = vsyncadd %s766, 0
          %s776 = smul.addr %s773, 8
          %s777 = scalar_lea.hbm %s3, %s776
          %s779 = sshll.u32 %s769, 4
          %s780 = int_to_ptr.vmem [resolvable:$true] %s779
          %s781 = sshll.u32 %s777, 4
          %s782 = int_to_ptr.hbm [resolvable:$true] %s781
          %784 = dma.vmem_to_hbm [thread:$0]  %s780, 512, %s782, %s766
        $region48: #{tpu_custom_call.1} parent=31 // pred_fallthru
          _
      $region32: #{tpu_custom_call.1} parent=5 // pred_fallthru
        _
      %p785 = scmp.le.s32.totalorder 2, %s14
      // Predicated region
      $region49: #{tpu_custom_call.1} parent=5 // pred_check
        %p786 = pneg %p785
      $region50: #{tpu_custom_call.1} parent=5 // pred_check_branch
        %788 = sbr.rel (%p786) target = $region52
      $region51: #{tpu_custom_call.1} parent=5 // pred_region
        %s789 = ssub.s32 %s14, 2
        // Predicated region
        $region53: #{tpu_custom_call.1} parent=51 // pred_check
          %p790 = pneg %p111
        $region54: #{tpu_custom_call.1} parent=51 // pred_check_branch
          %792 = sbr.rel (%p790) target = $region56
        $region55: #{tpu_custom_call.1} parent=51 // pred_region
          %s793 = sand.u32 %s96, 1
          %s794 = scalar_lea.sflag [#allocation4], %s793
          %s795 = sand.u32 %s96, 1
          %s796 = smul.addr %s795, 32
          %s797 = scalar_lea.vmem [#allocation8], %s796
          %799 = dma.done %s794, 512
        $region56: #{tpu_custom_call.1} parent=51 // pred_fallthru
          _
      $region52: #{tpu_custom_call.1} parent=5 // pred_fallthru
        _
    $region6: #{tpu_custom_call.1} parent=1 // loop_footer
      %s18 = sadd.s32 1, %s14
    $region7: #{tpu_custom_call.1} parent=1 // loop_footer_branch
      %13 = sbr.rel target = $region3
    $region8: #{tpu_custom_call.1} parent=1 // loop_exit
      _
    %800 = vsyncpa [#allocation3], 1
    %s801 = scalar_lea.sflag [#allocation3], 1
    %802 = vsyncpa %s801, 1
    %803 = vsyncpa [#allocation6], 1
    %804 = vsyncpa [#allocation4], 1
    %s805 = scalar_lea.sflag [#allocation4], 1
    %806 = vsyncpa %s805, 1

</llo_original>
